<compile_context>
chip_gen: v7x
topology: tpu7x:2x2x1
jax: 0.10.0
libtpu: 0.0.40
codegen_flags: <defaults>
</compile_context>

<pallas_src>
import functools

import jax
import jax.numpy as jnp
from jax.experimental import pallas as pl
from jax.experimental.pallas import tpu as pltpu


# ----------------------------- Pallas kernel ------------------------------ #
def _graphsage_kernel(x_ref, xj_ref, w1_ref, b1_ref, w2x_ref, w2j_ref, b2_ref,
                      o_ref):
    # x_ref  : (tm, C)        centre-node features
    # xj_ref : (tm, K, C)     gathered neighbour features
    # w1_ref : (C, C)         nn1 weight (in -> out)
    # b1_ref : (1, C)
    # w2x_ref: (C, Cout)      nn2 weight columns acting on x
    # w2j_ref: (C, Cout)      nn2 weight columns acting on aggregated x_j
    # b2_ref : (1, Cout)
    # o_ref  : (tm, Cout)
    tm, K, C = xj_ref.shape

    # nn1 on every neighbour feature: one big MXU matmul over (tm*K, C).
    xj = xj_ref[...].reshape(tm * K, C)
    h = jnp.dot(xj, w1_ref[...], preferred_element_type=jnp.float32)
    h = jnp.maximum(h + b1_ref[...], 0.0)                      # bias + ReLU (VPU)

    # Max aggregation over the K neighbours (sublane reduction).
    h_max = jnp.max(h.reshape(tm, K, C), axis=1)               # (tm, C)

    # nn2 on [x, h_max] without materializing the concat: split weight columns.
    acc = jnp.dot(x_ref[...], w2x_ref[...], preferred_element_type=jnp.float32)
    acc = acc + jnp.dot(h_max.astype(x_ref.dtype), w2j_ref[...],
                        preferred_element_type=jnp.float32)
    acc = acc + b2_ref[...]
    o_ref[...] = jnp.maximum(acc, 0.0).astype(o_ref.dtype)     # ReLU + store


def _graphsage_pallas(x_flat, xj_flat, w1, b1, w2x, w2j, b2, *, tm_max=1024):
    """x_flat: (M, C), xj_flat: (M, K, C)  ->  (M, Cout)."""
    M, C = x_flat.shape
    K = xj_flat.shape[1]
    Cout = w2x.shape[1]

    # Node-tile: as large as a per-buffer VMEM budget allows (keeps the
    # double-buffered pipeline comfortably inside every generation's VMEM,
    # including v7x's 64 MiB), multiple of 8 sublanes, capped at padded M.
    bytes_per_row = (K * C + C) * x_flat.dtype.itemsize
    budget = 4 * 1024 * 1024                                   # ~4 MiB / input buffer
    tm = max(8, min(tm_max, budget // max(bytes_per_row, 1)))
    tm = (tm // 8) * 8
    m_ceil = pl.cdiv(M, 8) * 8
    tm = min(tm, m_ceil)
    Mp = pl.cdiv(M, tm) * tm

    if Mp != M:
        x_flat = jnp.pad(x_flat, ((0, Mp - M), (0, 0)))
        xj_flat = jnp.pad(xj_flat, ((0, Mp - M), (0, 0), (0, 0)))

    out = pl.pallas_call(
        _graphsage_kernel,
        out_shape=jax.ShapeDtypeStruct((Mp, Cout), x_flat.dtype),
        grid_spec=pltpu.PrefetchScalarGridSpec(
            num_scalar_prefetch=0,
            grid=(Mp // tm,),
            in_specs=[
                pl.BlockSpec((tm, C), lambda i: (i, 0)),        # x tile
                pl.BlockSpec((tm, K, C), lambda i: (i, 0, 0)),  # x_j tile
                # Tiny parameters: constant block index -> loaded once, resident.
                pl.BlockSpec((C, C), lambda i: (0, 0)),
                pl.BlockSpec((1, C), lambda i: (0, 0)),
                pl.BlockSpec((C, Cout), lambda i: (0, 0)),
                pl.BlockSpec((C, Cout), lambda i: (0, 0)),
                pl.BlockSpec((1, Cout), lambda i: (0, 0)),
            ],
            out_specs=pl.BlockSpec((tm, Cout), lambda i: (i, 0)),
        ),
        compiler_params=pltpu.CompilerParams(
            dimension_semantics=("parallel",),                  # v7x: shard over 2 TCs
        ),
    )(x_flat, xj_flat, w1, b1, w2x, w2j, b2)

    return out if Mp == M else out[:M]


# ------------------------------- wrapper ---------------------------------- #
@jax.jit
def graphsage_forward(x, edge_index, w1, b1, w2, b2, y=None):
    """GraphSAGE forward (act='relu', norm=None, bias=True).

    x          : (B, C, N, 1)            dense vertex features (PyTorch layout)
    edge_index : (2, B, N, K) int        edge_index[0] = neighbour indices
    w1, b1     : (C, C, 1, 1), (C,)      nn1 = Conv2d(C, C, 1) + ReLU
    w2, b2     : (Cout, 2C, 1, 1), (Cout,)  nn2 = Conv2d(2C, Cout, 1) + ReLU
    y          : optional (B, C, Ny, 1)  gather source (as in the PyTorch module)
    returns    : (B, Cout, N, 1)
    """
    B, C, N, _ = x.shape
    Cout = w2.shape[0]
    idx = edge_index[0].astype(jnp.int32)                       # (B, N, K)
    K = idx.shape[-1]

    x_bnc = jnp.transpose(x[:, :, :, 0], (0, 2, 1))             # (B, N, C)
    src = x_bnc if y is None else jnp.transpose(y[:, :, :, 0], (0, 2, 1))

    # batched_index_select: x_j[b, n, k, :] = src[b, idx[b, n, k], :]
    xj = jax.vmap(lambda sb, ib: sb[ib])(src, idx)              # (B, N, K, C)

    M = B * N
    x_flat = x_bnc.reshape(M, C)
    xj_flat = xj.reshape(M, K, C)

    # Conv2d 1x1 weights -> matmul form (in_ch, out_ch); split nn2 for the concat.
    W1 = jnp.transpose(w1[:, :, 0, 0])                          # (C, C)
    W2 = jnp.transpose(w2[:, :, 0, 0])                          # (2C, Cout)
    W2x, W2j = W2[:C], W2[C:]
    b1_2d = b1.reshape(1, C)
    b2_2d = b2.reshape(1, Cout)

    out_flat = _graphsage_pallas(x_flat, xj_flat, W1, b1_2d, W2x, W2j, b2_2d)
    out = out_flat.reshape(B, N, Cout)
    return jnp.transpose(out, (0, 2, 1))[:, :, :, None]         # (B, Cout, N, 1)


# --------------------------- pure-JAX reference ---------------------------- #
def _reference_graphsage(x, edge_index, w1, b1, w2, b2):
    B, C, N, _ = x.shape
    idx = edge_index[0].astype(jnp.int32)
    x_bnc = jnp.transpose(x[:, :, :, 0], (0, 2, 1))             # (B, N, C)
    xj = jax.vmap(lambda sb, ib: sb[ib])(x_bnc, idx)            # (B, N, K, C)
    W1 = jnp.transpose(w1[:, :, 0, 0])
    h = jax.nn.relu(xj @ W1 + b1)                               # nn1
    h_max = jnp.max(h, axis=2)                                  # max over K
    cat = jnp.concatenate([x_bnc, h_max], axis=-1)              # (B, N, 2C)
    W2 = jnp.transpose(w2[:, :, 0, 0])
    out = jax.nn.relu(cat @ W2 + b2)                            # nn2
    return jnp.transpose(out, (0, 2, 1))[:, :, :, None]


# ------------------------------- main -------------------------------------- #
if __name__ == "__main__":
    # Small shapes consistent with the module: GraphSAGE(32, 32), 16 vertices,
    # 8 neighbours per vertex, batch 2.
    B, Cin, Cout, N, K = 2, 32, 32, 16, 8

    key = jax.random.PRNGKey(0)
    kx, ki, k1, kb1, k2, kb2 = jax.random.split(key, 6)

    x = jax.random.normal(kx, (B, Cin, N, 1), dtype=jnp.float32)
    nn_idx = jax.random.randint(ki, (B, N, K), 0, N, dtype=jnp.int32)
    center = jnp.broadcast_to(jnp.arange(N, dtype=jnp.int32)[None, :, None],
                              (B, N, K))
    edge_index = jnp.stack([nn_idx, center], axis=0)            # (2, B, N, K)

    # Deterministic synthetic parameters (shapes from nn.Conv2d(.., 1)).
    w1 = jax.random.normal(k1, (Cin, Cin, 1, 1), dtype=jnp.float32) * 0.1
    b1 = jax.random.normal(kb1, (Cin,), dtype=jnp.float32) * 0.1
    w2 = jax.random.normal(k2, (Cout, 2 * Cin, 1, 1), dtype=jnp.float32) * 0.1
    b2 = jax.random.normal(kb2, (Cout,), dtype=jnp.float32) * 0.1

    out = graphsage_forward(x, edge_index, w1, b1, w2, b2)
    out = jax.block_until_ready(out)

    ref = _reference_graphsage(x, edge_index, w1, b1, w2, b2)
    assert out.shape == (B, Cout, N, 1), out.shape
    max_err = float(jnp.max(jnp.abs(out - ref)))
    assert jnp.allclose(out, ref, atol=1e-4, rtol=1e-4), max_err

    print("KERNEL_OK")
</pallas_src>

<mosaic_0001>
module attributes {stable_mosaic.version = 11 : i64} {
  func.func @_graphsage_kernel(%arg0: i32, %arg1: memref<32x32xf32, #tpu.memory_space<vmem>>, %arg2: memref<32x8x32xf32, #tpu.memory_space<vmem>>, %arg3: memref<32x32xf32, #tpu.memory_space<vmem>>, %arg4: memref<1x32xf32, #tpu.memory_space<vmem>>, %arg5: memref<32x32xf32, #tpu.memory_space<vmem>>, %arg6: memref<32x32xf32, #tpu.memory_space<vmem>>, %arg7: memref<1x32xf32, #tpu.memory_space<vmem>>, %arg8: memref<32x32xf32, #tpu.memory_space<vmem>>) attributes {dimension_semantics = [#tpu.dimension_semantics<parallel>], iteration_bounds = array<i64: 1>, scalar_prefetch = 0 : i64, scratch_operands = 0 : i64, tpu.core_type = #tpu.core_type<tc>, window_params = [{transform_indices = @transform_0, window_bounds = array<i64: 32, 32>}, {transform_indices = @transform_1, window_bounds = array<i64: 32, 8, 32>}, {pipeline_mode = #tpu.pipeline_mode<synchronous>, transform_indices = @transform_2, window_bounds = array<i64: 32, 32>}, {pipeline_mode = #tpu.pipeline_mode<synchronous>, transform_indices = @transform_3, window_bounds = array<i64: 1, 32>}, {pipeline_mode = #tpu.pipeline_mode<synchronous>, transform_indices = @transform_4, window_bounds = array<i64: 32, 32>}, {pipeline_mode = #tpu.pipeline_mode<synchronous>, transform_indices = @transform_5, window_bounds = array<i64: 32, 32>}, {pipeline_mode = #tpu.pipeline_mode<synchronous>, transform_indices = @transform_6, window_bounds = array<i64: 1, 32>}, {transform_indices = @transform_7, window_bounds = array<i64: 32, 32>}]} {
    %c0 = arith.constant 0 : index
    %c0_0 = arith.constant 0 : index
    %c0_1 = arith.constant 0 : index
    %0 = vector.load %arg2[%c0, %c0_0, %c0_1] : memref<32x8x32xf32, #tpu.memory_space<vmem>>, vector<32x8x32xf32>
    %1 = vector.shape_cast %0 : vector<32x8x32xf32> to vector<256x32xf32>
    %c0_2 = arith.constant 0 : index
    %c0_3 = arith.constant 0 : index
    %2 = vector.load %arg3[%c0_2, %c0_3] : memref<32x32xf32, #tpu.memory_space<vmem>>, vector<32x32xf32>
    %cst = arith.constant dense<0.000000e+00> : vector<256x32xf32>
    %3 = tpu.matmul %1, %2, %cst {dimension_numbers = #tpu.dot_dimension_numbers<[1], [0], [0], [1], [0, 0, 1, 1], [], []>} : vector<256x32xf32>, vector<32x32xf32>, vector<256x32xf32> -> vector<256x32xf32>
    %c0_4 = arith.constant 0 : index
    %c0_5 = arith.constant 0 : index
    %4 = vector.load %arg4[%c0_4, %c0_5] : memref<1x32xf32, #tpu.memory_space<vmem>>, vector<1x32xf32>
    %5 = vector.broadcast %4 : vector<1x32xf32> to vector<256x32xf32>
    %6 = arith.addf %3, %5 : vector<256x32xf32>
    %cst_6 = arith.constant 0.000000e+00 : f32
    %7 = vector.broadcast %cst_6 : f32 to vector<256x32xf32>
    %8 = arith.maximumf %6, %7 : vector<256x32xf32>
    %9 = vector.shape_cast %8 : vector<256x32xf32> to vector<32x8x32xf32>
    %cst_7 = arith.constant dense<0xFF800000> : vector<32x32xf32>
    %10 = vector.multi_reduction <maximumf>, %9, %cst_7 [1] : vector<32x8x32xf32> to vector<32x32xf32>
    %c0_8 = arith.constant 0 : index
    %c0_9 = arith.constant 0 : index
    %11 = vector.load %arg1[%c0_8, %c0_9] : memref<32x32xf32, #tpu.memory_space<vmem>>, vector<32x32xf32>
    %c0_10 = arith.constant 0 : index
    %c0_11 = arith.constant 0 : index
    %12 = vector.load %arg5[%c0_10, %c0_11] : memref<32x32xf32, #tpu.memory_space<vmem>>, vector<32x32xf32>
    %cst_12 = arith.constant dense<0.000000e+00> : vector<32x32xf32>
    %13 = tpu.matmul %11, %12, %cst_12 {dimension_numbers = #tpu.dot_dimension_numbers<[1], [0], [0], [1], [0, 0, 1, 1], [], []>} : vector<32x32xf32>, vector<32x32xf32>, vector<32x32xf32> -> vector<32x32xf32>
    %c0_13 = arith.constant 0 : index
    %c0_14 = arith.constant 0 : index
    %14 = vector.load %arg6[%c0_13, %c0_14] : memref<32x32xf32, #tpu.memory_space<vmem>>, vector<32x32xf32>
    %cst_15 = arith.constant dense<0.000000e+00> : vector<32x32xf32>
    %15 = tpu.matmul %10, %14, %cst_15 {dimension_numbers = #tpu.dot_dimension_numbers<[1], [0], [0], [1], [0, 0, 1, 1], [], []>} : vector<32x32xf32>, vector<32x32xf32>, vector<32x32xf32> -> vector<32x32xf32>
    %16 = arith.addf %13, %15 : vector<32x32xf32>
    %c0_16 = arith.constant 0 : index
    %c0_17 = arith.constant 0 : index
    %17 = vector.load %arg7[%c0_16, %c0_17] : memref<1x32xf32, #tpu.memory_space<vmem>>, vector<1x32xf32>
    %18 = vector.broadcast %17 : vector<1x32xf32> to vector<32x32xf32>
    %19 = arith.addf %16, %18 : vector<32x32xf32>
    %cst_18 = arith.constant 0.000000e+00 : f32
    %20 = vector.broadcast %cst_18 : f32 to vector<32x32xf32>
    %21 = arith.maximumf %19, %20 : vector<32x32xf32>
    %c0_19 = arith.constant 0 : index
    %c0_20 = arith.constant 0 : index
    %22 = vector.load %arg8[%c0_19, %c0_20] : memref<32x32xf32, #tpu.memory_space<vmem>>, vector<32x32xf32>
    tpu.vector_store %arg8[%c0_19, %c0_20], %21 {strides = array<i32>} : memref<32x32xf32, #tpu.memory_space<vmem>>, vector<32x32xf32>,
    return
  }
  func.func @transform_0(%arg0: i32) -> (i32, i32) {
    %c0_i32 = arith.constant 0 : i32
    %c0_i32_0 = arith.constant 0 : i32
    return %arg0, %c0_i32 : i32, i32
  }
  func.func @transform_1(%arg0: i32) -> (i32, i32, i32) {
    %c0_i32 = arith.constant 0 : i32
    %c0_i32_0 = arith.constant 0 : i32
    %c0_i32_1 = arith.constant 0 : i32
    return %arg0, %c0_i32, %c0_i32_0 : i32, i32, i32
  }
  func.func @transform_2(%arg0: i32) -> (i32, i32) {
    %c0_i32 = arith.constant 0 : i32
    %c0_i32_0 = arith.constant 0 : i32
    %c0_i32_1 = arith.constant 0 : i32
    return %c0_i32, %c0_i32_0 : i32, i32
  }
  func.func @transform_3(%arg0: i32) -> (i32, i32) {
    %c0_i32 = arith.constant 0 : i32
    %c0_i32_0 = arith.constant 0 : i32
    %c0_i32_1 = arith.constant 0 : i32
    return %c0_i32, %c0_i32_0 : i32, i32
  }
  func.func @transform_4(%arg0: i32) -> (i32, i32) {
    %c0_i32 = arith.constant 0 : i32
    %c0_i32_0 = arith.constant 0 : i32
    %c0_i32_1 = arith.constant 0 : i32
    return %c0_i32, %c0_i32_0 : i32, i32
  }
  func.func @transform_5(%arg0: i32) -> (i32, i32) {
    %c0_i32 = arith.constant 0 : i32
    %c0_i32_0 = arith.constant 0 : i32
    %c0_i32_1 = arith.constant 0 : i32
    return %c0_i32, %c0_i32_0 : i32, i32
  }
  func.func @transform_6(%arg0: i32) -> (i32, i32) {
    %c0_i32 = arith.constant 0 : i32
    %c0_i32_0 = arith.constant 0 : i32
    %c0_i32_1 = arith.constant 0 : i32
    return %c0_i32, %c0_i32_0 : i32, i32
  }
  func.func @transform_7(%arg0: i32) -> (i32, i32) {
    %c0_i32 = arith.constant 0 : i32
    %c0_i32_0 = arith.constant 0 : i32
    return %arg0, %c0_i32 : i32, i32
  }
}

</mosaic_0001>

<llo_original>
// kernel: graphsage_forward.1
$region0: #{graphsage_forward.1}
  #allocation0 [shape = 'u32[]', space=smem, size = 0x4, offset = 0x4, fixed_abs, tag = 'smem constant byte address 0x4 - core index']
  #allocation1 [shape = 'u32[144,128]{1,0:T(1,128)}', space=vmem, size = 0x12000, scoped, tag = 'internal scratch']
  %s0 = inlined_call_operand.vmem [shape: f32[32,32], index: 0, kind: input, shape index: {}]
  %s1 = inlined_call_operand.vmem [shape: f32[32,8,32], index: 1, kind: input, shape index: {}]
  %s2 = inlined_call_operand.vmem [shape: f32[32,32], index: 2, kind: input, shape index: {}]
  %s3 = inlined_call_operand.vmem [shape: f32[1,32], index: 3, kind: input, shape index: {}]
  %s4 = inlined_call_operand.vmem [shape: f32[32,32], index: 4, kind: input, shape index: {}]
  %s5 = inlined_call_operand.vmem [shape: f32[32,32], index: 5, kind: input, shape index: {}]
  %s6 = inlined_call_operand.vmem [shape: f32[1,32], index: 6, kind: input, shape index: {}]
  %s7 = inlined_call_operand.hbm [shape: f32[32,32], index: 7, kind: output, shape index: {}]
  %s8 = sld [smem:[#allocation0]]
  $region38: #{graphsage_forward.1} parent=0
    _
  %s10 = ssub.s32 1, %s8
  %s11 = scalar_select 0, %s10, %s8
  $region1: #{graphsage_forward.1} parent=0
    #allocation2 [shape = 'u8[16384]{0}', space=vmem, size = 0x4000, scoped, tag = 'output window, operand 0, single buffered']
    #allocation3 [shape = 's32[1]{0}', space=sflag, size = 0x4, scoped, tag = 'scoped memory for graphsage_forward.1']
    %12 = vsyncpa [#allocation3], 0
    // Predicated region
    $region2: #{graphsage_forward.1} parent=1 // pred_check
      _
    $region3: #{graphsage_forward.1} parent=1 // pred_check_branch
      %14 = sbr.rel (0) target = $region5
    $region4: #{graphsage_forward.1} parent=1 // pred_region
      _
    $region5: #{graphsage_forward.1} parent=1 // pred_fallthru
      _
    // Predicated region
    $region6: #{graphsage_forward.1} parent=1 // pred_check
      _
    $region7: #{graphsage_forward.1} parent=1 // pred_check_branch
      %16 = sbr.rel (0) target = $region9
    $region8: #{graphsage_forward.1} parent=1 // pred_region
      _
    $region9: #{graphsage_forward.1} parent=1 // pred_fallthru
      _
    // Predicated region
    $region10: #{graphsage_forward.1} parent=1 // pred_check
      _
    $region11: #{graphsage_forward.1} parent=1 // pred_check_branch
      %18 = sbr.rel (0) target = $region13
    $region12: #{graphsage_forward.1} parent=1 // pred_region
      _
    $region13: #{graphsage_forward.1} parent=1 // pred_fallthru
      _
    // Predicated region
    $region14: #{graphsage_forward.1} parent=1 // pred_check
      _
    $region15: #{graphsage_forward.1} parent=1 // pred_check_branch
      %20 = sbr.rel (0) target = $region17
    $region16: #{graphsage_forward.1} parent=1 // pred_region
      _
    $region17: #{graphsage_forward.1} parent=1 // pred_fallthru
      _
    // Predicated region
    $region18: #{graphsage_forward.1} parent=1 // pred_check
      _
    $region19: #{graphsage_forward.1} parent=1 // pred_check_branch
      %22 = sbr.rel (0) target = $region21
    $region20: #{graphsage_forward.1} parent=1 // pred_region
      _
    $region21: #{graphsage_forward.1} parent=1 // pred_fallthru
      _
    // Predicated region
    $region22: #{graphsage_forward.1} parent=1 // pred_check
      _
    $region23: #{graphsage_forward.1} parent=1 // pred_check_branch
      %24 = sbr.rel (0) target = $region25
    $region24: #{graphsage_forward.1} parent=1 // pred_region
      _
    $region25: #{graphsage_forward.1} parent=1 // pred_fallthru
      _
    // Predicated region
    $region26: #{graphsage_forward.1} parent=1 // pred_check
      _
    $region27: #{graphsage_forward.1} parent=1 // pred_check_branch
      %26 = sbr.rel (0) target = $region29
    $region28: #{graphsage_forward.1} parent=1 // pred_region
      _
    $region29: #{graphsage_forward.1} parent=1 // pred_fallthru
      _
    %v27 = vld [vmem:[%s1] sm:$0xff]
    %v28 = vld [vmem:[%s1 + $0x8] sm:$0xff]
    %v29 = vld [vmem:[%s1 + $0x10] sm:$0xff]
    %v30 = vld [vmem:[%s1 + $0x18] sm:$0xff]
    %v31 = vld [vmem:[%s1 + $0x20] sm:$0xff]
    %v32 = vld [vmem:[%s1 + $0x28] sm:$0xff]
    %v33 = vld [vmem:[%s1 + $0x30] sm:$0xff]
    %v34 = vld [vmem:[%s1 + $0x38] sm:$0xff]
    %v35 = vld [vmem:[%s1 + $0x40] sm:$0xff]
    %v36 = vld [vmem:[%s1 + $0x48] sm:$0xff]
    %v37 = vld [vmem:[%s1 + $0x50] sm:$0xff]
    %v38 = vld [vmem:[%s1 + $0x58] sm:$0xff]
    %v39 = vld [vmem:[%s1 + $0x60] sm:$0xff]
    %v40 = vld [vmem:[%s1 + $0x68] sm:$0xff]
    %v41 = vld [vmem:[%s1 + $0x70] sm:$0xff]
    %v42 = vld [vmem:[%s1 + $0x78] sm:$0xff]
    %v43 = vld [vmem:[%s1 + $0x80] sm:$0xff]
    %v44 = vld [vmem:[%s1 + $0x88] sm:$0xff]
    %v45 = vld [vmem:[%s1 + $0x90] sm:$0xff]
    %v46 = vld [vmem:[%s1 + $0x98] sm:$0xff]
    %v47 = vld [vmem:[%s1 + $0xa0] sm:$0xff]
    %v48 = vld [vmem:[%s1 + $0xa8] sm:$0xff]
    %v49 = vld [vmem:[%s1 + $0xb0] sm:$0xff]
    %v50 = vld [vmem:[%s1 + $0xb8] sm:$0xff]
    %v51 = vld [vmem:[%s1 + $0xc0] sm:$0xff]
    %v52 = vld [vmem:[%s1 + $0xc8] sm:$0xff]
    %v53 = vld [vmem:[%s1 + $0xd0] sm:$0xff]
    %v54 = vld [vmem:[%s1 + $0xd8] sm:$0xff]
    %v55 = vld [vmem:[%s1 + $0xe0] sm:$0xff]
    %v56 = vld [vmem:[%s1 + $0xe8] sm:$0xff]
    %v57 = vld [vmem:[%s1 + $0xf0] sm:$0xff]
    %v58 = vld [vmem:[%s1 + $0xf8] sm:$0xff]
    %v59 = vld [vmem:[%s2] sm:$0xff]
    %v60 = vld [vmem:[%s2 + $0x8] sm:$0xff]
    %v61 = vld [vmem:[%s2 + $0x10] sm:$0xff]
    %v62 = vld [vmem:[%s2 + $0x18] sm:$0xff]
    %v63 = vld [vmem:[%s3] sm:$0x1]
    %v65 = vlaneseq
    %v66 = vshrl.u32 %v65, 7
    %v67 = vsub.s32 0, %v66
    %v68 = vrot.slane %v63, %v67
    %vm70 = vcmask 261120
    %v72 = vsel %vm70, %v27, 0
    %v75 = vsel %vm70, %v28, 0
    %v78 = vsel %vm70, %v29, 0
    %v81 = vsel %vm70, %v30, 0
    %v84 = vsel %vm70, %v31, 0
    %v87 = vsel %vm70, %v32, 0
    %v90 = vsel %vm70, %v33, 0
    %v93 = vsel %vm70, %v34, 0
    %v96 = vsel %vm70, %v35, 0
    %v99 = vsel %vm70, %v36, 0
    %v102 = vsel %vm70, %v37, 0
    %v105 = vsel %vm70, %v38, 0
    %v108 = vsel %vm70, %v39, 0
    %v111 = vsel %vm70, %v40, 0
    %v114 = vsel %vm70, %v41, 0
    %v117 = vsel %vm70, %v42, 0
    %v120 = vsel %vm70, %v43, 0
    %v123 = vsel %vm70, %v44, 0
    %v126 = vsel %vm70, %v45, 0
    %v129 = vsel %vm70, %v46, 0
    %v132 = vsel %vm70, %v47, 0
    %v135 = vsel %vm70, %v48, 0
    %v138 = vsel %vm70, %v49, 0
    %v141 = vsel %vm70, %v50, 0
    %v144 = vsel %vm70, %v51, 0
    %v147 = vsel %vm70, %v52, 0
    %v150 = vsel %vm70, %v53, 0
    %v153 = vsel %vm70, %v54, 0
    %v156 = vsel %vm70, %v55, 0
    %v159 = vsel %vm70, %v56, 0
    %v162 = vsel %vm70, %v57, 0
    %v165 = vsel %vm70, %v58, 0
    %167 = vmatprep.subr.mxu0 0.0
    %168 = vmatpush1.msra.mxu0 %v59
    %169 = vmatprep.subr.mxu0 0.0
    %170 = vmatpush1.msra.mxu0 %v60
    %171 = vmatprep.subr.mxu0 0.0
    %172 = vmatpush1.msra.mxu0 %v61
    %173 = vmatprep.subr.mxu0 0.0
    %174 = vmatpush1.msra.mxu0 %v62
    %175 = vmatprep.subr.mxu0 0.0
    %176 = vmatpush1.msra.mxu0 0.0
    %177 = vmatprep.subr.mxu0 0.0
    %178 = vmatpush1.msra.mxu0 0.0
    %179 = vmatprep.subr.mxu0 0.0
    %180 = vmatpush1.msra.mxu0 0.0
    %181 = vmatprep.subr.mxu0 0.0
    %182 = vmatpush1.msra.mxu0 0.0
    %183 = vmatprep.subr.mxu0 0.0
    %184 = vmatpush1.msra.mxu0 0.0
    %185 = vmatprep.subr.mxu0 0.0
    %186 = vmatpush1.msra.mxu0 0.0
    %187 = vmatprep.subr.mxu0 0.0
    %188 = vmatpush1.msra.mxu0 0.0
    %189 = vmatprep.subr.mxu0 0.0
    %190 = vmatpush1.msra.mxu0 0.0
    %191 = vmatprep.subr.mxu0 0.0
    %192 = vmatpush1.msra.mxu0 0.0
    %193 = vmatprep.subr.mxu0 0.0
    %194 = vmatpush1.msra.mxu0 0.0
    %195 = vmatprep.subr.mxu0 0.0
    %196 = vmatpush1.msra.mxu0 0.0
    %197 = vmatprep.subr.mxu0 0.0
    %198 = vmatpush1.msra.mxu0 0.0
    %199 = vmatprep.subr.mxu0 0.0
    %200 = vmatpush1.msra.mxu0 0.0
    %201 = vmatprep.subr.mxu0 0.0
    %202 = vmatpush1.msra.mxu0 0.0
    %203 = vmatprep.subr.mxu0 0.0
    %204 = vmatpush1.msra.mxu0 0.0
    %205 = vmatprep.subr.mxu0 0.0
    %206 = vmatpush1.msra.mxu0 0.0
    %207 = vmatprep.subr.mxu0 0.0
    %208 = vmatpush1.msra.mxu0 0.0
    %209 = vmatprep.subr.mxu0 0.0
    %210 = vmatpush1.msra.mxu0 0.0
    %211 = vmatprep.subr.mxu0 0.0
    %212 = vmatpush1.msra.mxu0 0.0
    %213 = vmatprep.subr.mxu0 0.0
    %214 = vmatpush1.msra.mxu0 0.0
    %215 = vmatprep.subr.mxu0 0.0
    %216 = vmatpush1.msra.mxu0 0.0
    %217 = vmatprep.subr.mxu0 0.0
    %218 = vmatpush1.msra.mxu0 0.0
    %219 = vmatprep.subr.mxu0 0.0
    %220 = vmatpush1.msra.mxu0 0.0
    %221 = vmatprep.subr.mxu0 0.0
    %222 = vmatpush1.msra.mxu0 0.0
    %223 = vmatprep.subr.mxu0 0.0
    %224 = vmatpush1.msra.mxu0 0.0
    %225 = vmatprep.subr.mxu0 0.0
    %226 = vmatpush1.msra.mxu0 0.0
    %227 = vmatprep.subr.mxu0 0.0
    %228 = vmatpush1.msra.mxu0 0.0
    %229 = vmatprep.subr.mxu0 0.0
    %230 = vmatpush1.msra.mxu0 0.0
    %231 = vmatprep.mubr.f32.mxu0 0.0
    %232 = vmatmul.mubr.f32.gmra.mrb[0].mxu0 %v72
    %v233 = vpop.f32.mrb[0].mxu0
    %v234 = vadd.f32 %v68, %v233
    %v235 = vpop.f32.mrb[0].mxu0
    %236 = vmatprep.mubr.f32.mxu0 0.0
    %237 = vmatmul.mubr.f32.gmra.mrb[0].mxu0 %v75
    %v238 = vpop.f32.mrb[0].mxu0
    %v239 = vadd.f32 %v68, %v238
    %v240 = vpop.f32.mrb[0].mxu0
    %241 = vmatprep.mubr.f32.mxu0 0.0
    %242 = vmatmul.mubr.f32.gmra.mrb[0].mxu0 %v78
    %v243 = vpop.f32.mrb[0].mxu0
    %v244 = vadd.f32 %v68, %v243
    %v245 = vpop.f32.mrb[0].mxu0
    %246 = vmatprep.mubr.f32.mxu0 0.0
    %247 = vmatmul.mubr.f32.gmra.mrb[0].mxu0 %v81
    %v248 = vpop.f32.mrb[0].mxu0
    %v249 = vadd.f32 %v68, %v248
    %v250 = vpop.f32.mrb[0].mxu0
    %251 = vmatprep.mubr.f32.mxu0 0.0
    %252 = vmatmul.mubr.f32.gmra.mrb[0].mxu0 %v84
    %v253 = vpop.f32.mrb[0].mxu0
    %v254 = vadd.f32 %v68, %v253
    %v255 = vpop.f32.mrb[0].mxu0
    %256 = vmatprep.mubr.f32.mxu0 0.0
    %257 = vmatmul.mubr.f32.gmra.mrb[0].mxu0 %v87
    %v258 = vpop.f32.mrb[0].mxu0
    %v259 = vadd.f32 %v68, %v258
    %v260 = vpop.f32.mrb[0].mxu0
    %261 = vmatprep.mubr.f32.mxu0 0.0
    %262 = vmatmul.mubr.f32.gmra.mrb[0].mxu0 %v90
    %v263 = vpop.f32.mrb[0].mxu0
    %v264 = vadd.f32 %v68, %v263
    %v265 = vpop.f32.mrb[0].mxu0
    %266 = vmatprep.mubr.f32.mxu0 0.0
    %267 = vmatmul.mubr.f32.gmra.mrb[0].mxu0 %v93
    %v268 = vpop.f32.mrb[0].mxu0
    %v269 = vadd.f32 %v68, %v268
    %v270 = vpop.f32.mrb[0].mxu0
    %271 = vmatprep.mubr.f32.mxu0 0.0
    %272 = vmatmul.mubr.f32.gmra.mrb[0].mxu0 %v96
    %v273 = vpop.f32.mrb[0].mxu0
    %v274 = vadd.f32 %v68, %v273
    %v275 = vpop.f32.mrb[0].mxu0
    %276 = vmatprep.mubr.f32.mxu0 0.0
    %277 = vmatmul.mubr.f32.gmra.mrb[0].mxu0 %v99
    %v278 = vpop.f32.mrb[0].mxu0
    %v279 = vadd.f32 %v68, %v278
    %v280 = vpop.f32.mrb[0].mxu0
    %281 = vmatprep.mubr.f32.mxu0 0.0
    %282 = vmatmul.mubr.f32.gmra.mrb[0].mxu0 %v102
    %v283 = vpop.f32.mrb[0].mxu0
    %v284 = vadd.f32 %v68, %v283
    %v285 = vpop.f32.mrb[0].mxu0
    %286 = vmatprep.mubr.f32.mxu0 0.0
    %287 = vmatmul.mubr.f32.gmra.mrb[0].mxu0 %v105
    %v288 = vpop.f32.mrb[0].mxu0
    %v289 = vadd.f32 %v68, %v288
    %v290 = vpop.f32.mrb[0].mxu0
    %291 = vmatprep.mubr.f32.mxu0 0.0
    %292 = vmatmul.mubr.f32.gmra.mrb[0].mxu0 %v108
    %v293 = vpop.f32.mrb[0].mxu0
    %v294 = vadd.f32 %v68, %v293
    %v295 = vpop.f32.mrb[0].mxu0
    %296 = vmatprep.mubr.f32.mxu0 0.0
    %297 = vmatmul.mubr.f32.gmra.mrb[0].mxu0 %v111
    %v298 = vpop.f32.mrb[0].mxu0
    %v299 = vadd.f32 %v68, %v298
    %v300 = vpop.f32.mrb[0].mxu0
    %301 = vmatprep.mubr.f32.mxu0 0.0
    %302 = vmatmul.mubr.f32.gmra.mrb[0].mxu0 %v114
    %v303 = vpop.f32.mrb[0].mxu0
    %v304 = vadd.f32 %v68, %v303
    %v305 = vpop.f32.mrb[0].mxu0
    %306 = vmatprep.mubr.f32.mxu0 0.0
    %307 = vmatmul.mubr.f32.gmra.mrb[0].mxu0 %v117
    %v308 = vpop.f32.mrb[0].mxu0
    %v309 = vadd.f32 %v68, %v308
    %v310 = vpop.f32.mrb[0].mxu0
    %311 = vmatprep.mubr.f32.mxu0 0.0
    %312 = vmatmul.mubr.f32.gmra.mrb[0].mxu0 %v120
    %v313 = vpop.f32.mrb[0].mxu0
    %v314 = vadd.f32 %v68, %v313
    %v315 = vpop.f32.mrb[0].mxu0
    %316 = vmatprep.mubr.f32.mxu0 0.0
    %317 = vmatmul.mubr.f32.gmra.mrb[0].mxu0 %v123
    %v318 = vpop.f32.mrb[0].mxu0
    %v319 = vadd.f32 %v68, %v318
    %v320 = vpop.f32.mrb[0].mxu0
    %321 = vmatprep.mubr.f32.mxu0 0.0
    %322 = vmatmul.mubr.f32.gmra.mrb[0].mxu0 %v126
    %v323 = vpop.f32.mrb[0].mxu0
    %v324 = vadd.f32 %v68, %v323
    %v325 = vpop.f32.mrb[0].mxu0
    %326 = vmatprep.mubr.f32.mxu0 0.0
    %327 = vmatmul.mubr.f32.gmra.mrb[0].mxu0 %v129
    %v328 = vpop.f32.mrb[0].mxu0
    %v329 = vadd.f32 %v68, %v328
    %v330 = vpop.f32.mrb[0].mxu0
    %331 = vmatprep.mubr.f32.mxu0 0.0
    %332 = vmatmul.mubr.f32.gmra.mrb[0].mxu0 %v132
    %v333 = vpop.f32.mrb[0].mxu0
    %v334 = vadd.f32 %v68, %v333
    %v335 = vpop.f32.mrb[0].mxu0
    %336 = vmatprep.mubr.f32.mxu0 0.0
    %337 = vmatmul.mubr.f32.gmra.mrb[0].mxu0 %v135
    %v338 = vpop.f32.mrb[0].mxu0
    %v339 = vadd.f32 %v68, %v338
    %v340 = vpop.f32.mrb[0].mxu0
    %341 = vmatprep.mubr.f32.mxu0 0.0
    %342 = vmatmul.mubr.f32.gmra.mrb[0].mxu0 %v138
    %v343 = vpop.f32.mrb[0].mxu0
    %v344 = vadd.f32 %v68, %v343
    %v345 = vpop.f32.mrb[0].mxu0
    %346 = vmatprep.mubr.f32.mxu0 0.0
    %347 = vmatmul.mubr.f32.gmra.mrb[0].mxu0 %v141
    %v348 = vpop.f32.mrb[0].mxu0
    %v349 = vadd.f32 %v68, %v348
    %v350 = vpop.f32.mrb[0].mxu0
    %351 = vmatprep.mubr.f32.mxu0 0.0
    %352 = vmatmul.mubr.f32.gmra.mrb[0].mxu0 %v144
    %v353 = vpop.f32.mrb[0].mxu0
    %v354 = vadd.f32 %v68, %v353
    %v355 = vpop.f32.mrb[0].mxu0
    %356 = vmatprep.mubr.f32.mxu0 0.0
    %357 = vmatmul.mubr.f32.gmra.mrb[0].mxu0 %v147
    %v358 = vpop.f32.mrb[0].mxu0
    %v359 = vadd.f32 %v68, %v358
    %v360 = vpop.f32.mrb[0].mxu0
    %361 = vmatprep.mubr.f32.mxu0 0.0
    %362 = vmatmul.mubr.f32.gmra.mrb[0].mxu0 %v150
    %v363 = vpop.f32.mrb[0].mxu0
    %v364 = vadd.f32 %v68, %v363
    %v365 = vpop.f32.mrb[0].mxu0
    %366 = vmatprep.mubr.f32.mxu0 0.0
    %367 = vmatmul.mubr.f32.gmra.mrb[0].mxu0 %v153
    %v368 = vpop.f32.mrb[0].mxu0
    %v369 = vadd.f32 %v68, %v368
    %v370 = vpop.f32.mrb[0].mxu0
    %371 = vmatprep.mubr.f32.mxu0 0.0
    %372 = vmatmul.mubr.f32.gmra.mrb[0].mxu0 %v156
    %v373 = vpop.f32.mrb[0].mxu0
    %v374 = vadd.f32 %v68, %v373
    %v375 = vpop.f32.mrb[0].mxu0
    %376 = vmatprep.mubr.f32.mxu0 0.0
    %377 = vmatmul.mubr.f32.gmra.mrb[0].mxu0 %v159
    %v378 = vpop.f32.mrb[0].mxu0
    %v379 = vadd.f32 %v68, %v378
    %v380 = vpop.f32.mrb[0].mxu0
    %381 = vmatprep.mubr.f32.mxu0 0.0
    %382 = vmatmul.mubr.f32.gmra.mrb[0].mxu0 %v162
    %v383 = vpop.f32.mrb[0].mxu0
    %v384 = vadd.f32 %v68, %v383
    %v385 = vpop.f32.mrb[0].mxu0
    %386 = vmatprep.mubr.f32.mxu0 0.0
    %387 = vmatmul.mubr.f32.gmra.mrb[0].mxu0 %v165
    %v388 = vpop.f32.mrb[0].mxu0
    %v389 = vadd.f32 %v68, %v388
    %v390 = vpop.f32.mrb[0].mxu0
    %391 = vdwg.mxu0
    %v392 = vmax.f32 %v234, 0.0
    %v393 = vmax.f32 %v239, 0.0
    %v394 = vmax.f32 %v244, 0.0
    %v395 = vmax.f32 %v249, 0.0
    %v396 = vmax.f32 %v254, 0.0
    %v397 = vmax.f32 %v259, 0.0
    %v398 = vmax.f32 %v264, 0.0
    %v399 = vmax.f32 %v269, 0.0
    %v400 = vmax.f32 %v274, 0.0
    %v401 = vmax.f32 %v279, 0.0
    %v402 = vmax.f32 %v284, 0.0
    %v403 = vmax.f32 %v289, 0.0
    %v404 = vmax.f32 %v294, 0.0
    %v405 = vmax.f32 %v299, 0.0
    %v406 = vmax.f32 %v304, 0.0
    %v407 = vmax.f32 %v309, 0.0
    %v408 = vmax.f32 %v314, 0.0
    %v409 = vmax.f32 %v319, 0.0
    %v410 = vmax.f32 %v324, 0.0
    %v411 = vmax.f32 %v329, 0.0
    %v412 = vmax.f32 %v334, 0.0
    %v413 = vmax.f32 %v339, 0.0
    %v414 = vmax.f32 %v344, 0.0
    %v415 = vmax.f32 %v349, 0.0
    %v416 = vmax.f32 %v354, 0.0
    %v417 = vmax.f32 %v359, 0.0
    %v418 = vmax.f32 %v364, 0.0
    %v419 = vmax.f32 %v369, 0.0
    %v420 = vmax.f32 %v374, 0.0
    %v421 = vmax.f32 %v379, 0.0
    %v422 = vmax.f32 %v384, 0.0
    %v423 = vmax.f32 %v389, 0.0
    %v424 = vsel %vm70, %v392, -inf
    %v425 = vrot.slane %v424, 4
    %v426 = vmax.f32 %v424, %v425
    %v427 = vrot.slane %v426, 2
    %v428 = vmax.f32 %v426, %v427
    %v429 = vrot.slane %v428, 1
    %v430 = vmax.f32 %v428, %v429
    %v431 = vsel %vm70, %v393, -inf
    %v432 = vrot.slane %v431, 4
    %v433 = vmax.f32 %v431, %v432
    %v434 = vrot.slane %v433, 2
    %v435 = vmax.f32 %v433, %v434
    %v436 = vrot.slane %v435, 1
    %v437 = vmax.f32 %v435, %v436
    %v438 = vsel %vm70, %v394, -inf
    %v439 = vrot.slane %v438, 4
    %v440 = vmax.f32 %v438, %v439
    %v441 = vrot.slane %v440, 2
    %v442 = vmax.f32 %v440, %v441
    %v443 = vrot.slane %v442, 1
    %v444 = vmax.f32 %v442, %v443
    %v445 = vsel %vm70, %v395, -inf
    %v446 = vrot.slane %v445, 4
    %v447 = vmax.f32 %v445, %v446
    %v448 = vrot.slane %v447, 2
    %v449 = vmax.f32 %v447, %v448
    %v450 = vrot.slane %v449, 1
    %v451 = vmax.f32 %v449, %v450
    %v452 = vsel %vm70, %v396, -inf
    %v453 = vrot.slane %v452, 4
    %v454 = vmax.f32 %v452, %v453
    %v455 = vrot.slane %v454, 2
    %v456 = vmax.f32 %v454, %v455
    %v457 = vrot.slane %v456, 1
    %v458 = vmax.f32 %v456, %v457
    %v459 = vsel %vm70, %v397, -inf
    %v460 = vrot.slane %v459, 4
    %v461 = vmax.f32 %v459, %v460
    %v462 = vrot.slane %v461, 2
    %v463 = vmax.f32 %v461, %v462
    %v464 = vrot.slane %v463, 1
    %v465 = vmax.f32 %v463, %v464
    %v466 = vsel %vm70, %v398, -inf
    %v467 = vrot.slane %v466, 4
    %v468 = vmax.f32 %v466, %v467
    %v469 = vrot.slane %v468, 2
    %v470 = vmax.f32 %v468, %v469
    %v471 = vrot.slane %v470, 1
    %v472 = vmax.f32 %v470, %v471
    %v473 = vsel %vm70, %v399, -inf
    %v474 = vrot.slane %v473, 4
    %v475 = vmax.f32 %v473, %v474
    %v476 = vrot.slane %v475, 2
    %v477 = vmax.f32 %v475, %v476
    %v478 = vrot.slane %v477, 1
    %v479 = vmax.f32 %v477, %v478
    %v480 = vsel %vm70, %v400, -inf
    %v481 = vrot.slane %v480, 4
    %v482 = vmax.f32 %v480, %v481
    %v483 = vrot.slane %v482, 2
    %v484 = vmax.f32 %v482, %v483
    %v485 = vrot.slane %v484, 1
    %v486 = vmax.f32 %v484, %v485
    %v487 = vsel %vm70, %v401, -inf
    %v488 = vrot.slane %v487, 4
    %v489 = vmax.f32 %v487, %v488
    %v490 = vrot.slane %v489, 2
    %v491 = vmax.f32 %v489, %v490
    %v492 = vrot.slane %v491, 1
    %v493 = vmax.f32 %v491, %v492
    %v494 = vsel %vm70, %v402, -inf
    %v495 = vrot.slane %v494, 4
    %v496 = vmax.f32 %v494, %v495
    %v497 = vrot.slane %v496, 2
    %v498 = vmax.f32 %v496, %v497
    %v499 = vrot.slane %v498, 1
    %v500 = vmax.f32 %v498, %v499
    %v501 = vsel %vm70, %v403, -inf
    %v502 = vrot.slane %v501, 4
    %v503 = vmax.f32 %v501, %v502
    %v504 = vrot.slane %v503, 2
    %v505 = vmax.f32 %v503, %v504
    %v506 = vrot.slane %v505, 1
    %v507 = vmax.f32 %v505, %v506
    %v508 = vsel %vm70, %v404, -inf
    %v509 = vrot.slane %v508, 4
    %v510 = vmax.f32 %v508, %v509
    %v511 = vrot.slane %v510, 2
    %v512 = vmax.f32 %v510, %v511
    %v513 = vrot.slane %v512, 1
    %v514 = vmax.f32 %v512, %v513
    %v515 = vsel %vm70, %v405, -inf
    %v516 = vrot.slane %v515, 4
    %v517 = vmax.f32 %v515, %v516
    %v518 = vrot.slane %v517, 2
    %v519 = vmax.f32 %v517, %v518
    %v520 = vrot.slane %v519, 1
    %v521 = vmax.f32 %v519, %v520
    %v522 = vsel %vm70, %v406, -inf
    %v523 = vrot.slane %v522, 4
    %v524 = vmax.f32 %v522, %v523
    %v525 = vrot.slane %v524, 2
    %v526 = vmax.f32 %v524, %v525
    %v527 = vrot.slane %v526, 1
    %v528 = vmax.f32 %v526, %v527
    %v529 = vsel %vm70, %v407, -inf
    %v530 = vrot.slane %v529, 4
    %v531 = vmax.f32 %v529, %v530
    %v532 = vrot.slane %v531, 2
    %v533 = vmax.f32 %v531, %v532
    %v534 = vrot.slane %v533, 1
    %v535 = vmax.f32 %v533, %v534
    %v536 = vsel %vm70, %v408, -inf
    %v537 = vrot.slane %v536, 4
    %v538 = vmax.f32 %v536, %v537
    %v539 = vrot.slane %v538, 2
    %v540 = vmax.f32 %v538, %v539
    %v541 = vrot.slane %v540, 1
    %v542 = vmax.f32 %v540, %v541
    %v543 = vsel %vm70, %v409, -inf
    %v544 = vrot.slane %v543, 4
    %v545 = vmax.f32 %v543, %v544
    %v546 = vrot.slane %v545, 2
    %v547 = vmax.f32 %v545, %v546
    %v548 = vrot.slane %v547, 1
    %v549 = vmax.f32 %v547, %v548
    %v550 = vsel %vm70, %v410, -inf
    %v551 = vrot.slane %v550, 4
    %v552 = vmax.f32 %v550, %v551
    %v553 = vrot.slane %v552, 2
    %v554 = vmax.f32 %v552, %v553
    %v555 = vrot.slane %v554, 1
    %v556 = vmax.f32 %v554, %v555
    %v557 = vsel %vm70, %v411, -inf
    %v558 = vrot.slane %v557, 4
    %v559 = vmax.f32 %v557, %v558
    %v560 = vrot.slane %v559, 2
    %v561 = vmax.f32 %v559, %v560
    %v562 = vrot.slane %v561, 1
    %v563 = vmax.f32 %v561, %v562
    %v564 = vsel %vm70, %v412, -inf
    %v565 = vrot.slane %v564, 4
    %v566 = vmax.f32 %v564, %v565
    %v567 = vrot.slane %v566, 2
    %v568 = vmax.f32 %v566, %v567
    %v569 = vrot.slane %v568, 1
    %v570 = vmax.f32 %v568, %v569
    %v571 = vsel %vm70, %v413, -inf
    %v572 = vrot.slane %v571, 4
    %v573 = vmax.f32 %v571, %v572
    %v574 = vrot.slane %v573, 2
    %v575 = vmax.f32 %v573, %v574
    %v576 = vrot.slane %v575, 1
    %v577 = vmax.f32 %v575, %v576
    %v578 = vsel %vm70, %v414, -inf
    %v579 = vrot.slane %v578, 4
    %v580 = vmax.f32 %v578, %v579
    %v581 = vrot.slane %v580, 2
    %v582 = vmax.f32 %v580, %v581
    %v583 = vrot.slane %v582, 1
    %v584 = vmax.f32 %v582, %v583
    %v585 = vsel %vm70, %v415, -inf
    %v586 = vrot.slane %v585, 4
    %v587 = vmax.f32 %v585, %v586
    %v588 = vrot.slane %v587, 2
    %v589 = vmax.f32 %v587, %v588
    %v590 = vrot.slane %v589, 1
    %v591 = vmax.f32 %v589, %v590
    %v592 = vsel %vm70, %v416, -inf
    %v593 = vrot.slane %v592, 4
    %v594 = vmax.f32 %v592, %v593
    %v595 = vrot.slane %v594, 2
    %v596 = vmax.f32 %v594, %v595
    %v597 = vrot.slane %v596, 1
    %v598 = vmax.f32 %v596, %v597
    %v599 = vsel %vm70, %v417, -inf
    %v600 = vrot.slane %v599, 4
    %v601 = vmax.f32 %v599, %v600
    %v602 = vrot.slane %v601, 2
    %v603 = vmax.f32 %v601, %v602
    %v604 = vrot.slane %v603, 1
    %v605 = vmax.f32 %v603, %v604
    %v606 = vsel %vm70, %v418, -inf
    %v607 = vrot.slane %v606, 4
    %v608 = vmax.f32 %v606, %v607
    %v609 = vrot.slane %v608, 2
    %v610 = vmax.f32 %v608, %v609
    %v611 = vrot.slane %v610, 1
    %v612 = vmax.f32 %v610, %v611
    %v613 = vsel %vm70, %v419, -inf
    %v614 = vrot.slane %v613, 4
    %v615 = vmax.f32 %v613, %v614
    %v616 = vrot.slane %v615, 2
    %v617 = vmax.f32 %v615, %v616
    %v618 = vrot.slane %v617, 1
    %v619 = vmax.f32 %v617, %v618
    %v620 = vsel %vm70, %v420, -inf
    %v621 = vrot.slane %v620, 4
    %v622 = vmax.f32 %v620, %v621
    %v623 = vrot.slane %v622, 2
    %v624 = vmax.f32 %v622, %v623
    %v625 = vrot.slane %v624, 1
    %v626 = vmax.f32 %v624, %v625
    %v627 = vsel %vm70, %v421, -inf
    %v628 = vrot.slane %v627, 4
    %v629 = vmax.f32 %v627, %v628
    %v630 = vrot.slane %v629, 2
    %v631 = vmax.f32 %v629, %v630
    %v632 = vrot.slane %v631, 1
    %v633 = vmax.f32 %v631, %v632
    %v634 = vsel %vm70, %v422, -inf
    %v635 = vrot.slane %v634, 4
    %v636 = vmax.f32 %v634, %v635
    %v637 = vrot.slane %v636, 2
    %v638 = vmax.f32 %v636, %v637
    %v639 = vrot.slane %v638, 1
    %v640 = vmax.f32 %v638, %v639
    %v641 = vsel %vm70, %v423, -inf
    %v642 = vrot.slane %v641, 4
    %v643 = vmax.f32 %v641, %v642
    %v644 = vrot.slane %v643, 2
    %v645 = vmax.f32 %v643, %v644
    %v646 = vrot.slane %v645, 1
    %v647 = vmax.f32 %v645, %v646
    %v648 = vld [vmem:[%s0] sm:$0xff]
    %v649 = vld [vmem:[%s0 + $0x8] sm:$0xff]
    %v650 = vld [vmem:[%s0 + $0x10] sm:$0xff]
    %v651 = vld [vmem:[%s0 + $0x18] sm:$0xff]
    %v652 = vld [vmem:[%s4] sm:$0xff]
    %v653 = vld [vmem:[%s4 + $0x8] sm:$0xff]
    %v654 = vld [vmem:[%s4 + $0x10] sm:$0xff]
    %v655 = vld [vmem:[%s4 + $0x18] sm:$0xff]
    %v656 = vld [vmem:[%s5] sm:$0xff]
    %v657 = vld [vmem:[%s5 + $0x8] sm:$0xff]
    %v658 = vld [vmem:[%s5 + $0x10] sm:$0xff]
    %v659 = vld [vmem:[%s5 + $0x18] sm:$0xff]
    %vm692 = vcmask 1041409
    %v693 = vsel %vm692, %v437, %v430
    %vm694 = vcmask 1042434
    %v695 = vsel %vm694, %v444, %v693
    %vm696 = vcmask 1043459
    %v697 = vsel %vm696, %v451, %v695
    %vm698 = vcmask 1044484
    %v699 = vsel %vm698, %v458, %v697
    %vm700 = vcmask 1045509
    %v701 = vsel %vm700, %v465, %v699
    %vm702 = vcmask 1046534
    %v703 = vsel %vm702, %v472, %v701
    %vm704 = vcmask 1047559
    %v705 = vsel %vm704, %v479, %v703
    %v706 = vsel %vm692, %v493, %v486
    %v707 = vsel %vm694, %v500, %v706
    %v708 = vsel %vm696, %v507, %v707
    %v709 = vsel %vm698, %v514, %v708
    %v710 = vsel %vm700, %v521, %v709
    %v711 = vsel %vm702, %v528, %v710
    %v712 = vsel %vm704, %v535, %v711
    %v713 = vsel %vm692, %v549, %v542
    %v714 = vsel %vm694, %v556, %v713
    %v715 = vsel %vm696, %v563, %v714
    %v716 = vsel %vm698, %v570, %v715
    %v717 = vsel %vm700, %v577, %v716
    %v718 = vsel %vm702, %v584, %v717
    %v719 = vsel %vm704, %v591, %v718
    %v720 = vsel %vm692, %v605, %v598
    %v721 = vsel %vm694, %v612, %v720
    %v722 = vsel %vm696, %v619, %v721
    %v723 = vsel %vm698, %v626, %v722
    %v724 = vsel %vm700, %v633, %v723
    %v725 = vsel %vm702, %v640, %v724
    %v726 = vsel %vm704, %v647, %v725
    %v727 = vsel %vm70, %v705, 0
    %v729 = vsel %vm70, %v712, 0
    %v731 = vsel %vm70, %v719, 0
    %v733 = vsel %vm70, %v726, 0
    %735 = vmatprep.subr.mxu0 0.0
    %736 = vmatpush1.msra.mxu0 %v656
    %737 = vmatprep.subr.mxu0 0.0
    %738 = vmatpush1.msra.mxu0 %v657
    %739 = vmatprep.subr.mxu0 0.0
    %740 = vmatpush1.msra.mxu0 %v658
    %741 = vmatprep.subr.mxu0 0.0
    %742 = vmatpush1.msra.mxu0 %v659
    %743 = vmatprep.subr.mxu0 0.0
    %744 = vmatpush1.msra.mxu0 0.0
    %745 = vmatprep.subr.mxu0 0.0
    %746 = vmatpush1.msra.mxu0 0.0
    %747 = vmatprep.subr.mxu0 0.0
    %748 = vmatpush1.msra.mxu0 0.0
    %749 = vmatprep.subr.mxu0 0.0
    %750 = vmatpush1.msra.mxu0 0.0
    %751 = vmatprep.subr.mxu0 0.0
    %752 = vmatpush1.msra.mxu0 0.0
    %753 = vmatprep.subr.mxu0 0.0
    %754 = vmatpush1.msra.mxu0 0.0
    %755 = vmatprep.subr.mxu0 0.0
    %756 = vmatpush1.msra.mxu0 0.0
    %757 = vmatprep.subr.mxu0 0.0
    %758 = vmatpush1.msra.mxu0 0.0
    %759 = vmatprep.subr.mxu0 0.0
    %760 = vmatpush1.msra.mxu0 0.0
    %761 = vmatprep.subr.mxu0 0.0
    %762 = vmatpush1.msra.mxu0 0.0
    %763 = vmatprep.subr.mxu0 0.0
    %764 = vmatpush1.msra.mxu0 0.0
    %765 = vmatprep.subr.mxu0 0.0
    %766 = vmatpush1.msra.mxu0 0.0
    %767 = vmatprep.subr.mxu0 0.0
    %768 = vmatpush1.msra.mxu0 0.0
    %769 = vmatprep.subr.mxu0 0.0
    %770 = vmatpush1.msra.mxu0 0.0
    %771 = vmatprep.subr.mxu0 0.0
    %772 = vmatpush1.msra.mxu0 0.0
    %773 = vmatprep.subr.mxu0 0.0
    %774 = vmatpush1.msra.mxu0 0.0
    %775 = vmatprep.subr.mxu0 0.0
    %776 = vmatpush1.msra.mxu0 0.0
    %777 = vmatprep.subr.mxu0 0.0
    %778 = vmatpush1.msra.mxu0 0.0
    %779 = vmatprep.subr.mxu0 0.0
    %780 = vmatpush1.msra.mxu0 0.0
    %781 = vmatprep.subr.mxu0 0.0
    %782 = vmatpush1.msra.mxu0 0.0
    %783 = vmatprep.subr.mxu0 0.0
    %784 = vmatpush1.msra.mxu0 0.0
    %785 = vmatprep.subr.mxu0 0.0
    %786 = vmatpush1.msra.mxu0 0.0
    %787 = vmatprep.subr.mxu0 0.0
    %788 = vmatpush1.msra.mxu0 0.0
    %789 = vmatprep.subr.mxu0 0.0
    %790 = vmatpush1.msra.mxu0 0.0
    %791 = vmatprep.subr.mxu0 0.0
    %792 = vmatpush1.msra.mxu0 0.0
    %793 = vmatprep.subr.mxu0 0.0
    %794 = vmatpush1.msra.mxu0 0.0
    %795 = vmatprep.subr.mxu0 0.0
    %796 = vmatpush1.msra.mxu0 0.0
    %797 = vmatprep.subr.mxu0 0.0
    %798 = vmatpush1.msra.mxu0 0.0
    %799 = vmatprep.mubr.f32.mxu0 0.0
    %800 = vmatmul.mubr.f32.gmra.mrb[0].mxu0 %v727
    %v801 = vpop.f32.mrb[0].mxu0
    %v802 = vadd.f32 0.0, %v801
    %v803 = vpop.f32.mrb[0].mxu0
    %804 = vmatprep.mubr.f32.mxu0 0.0
    %805 = vmatmul.mubr.f32.gmra.mrb[0].mxu0 %v729
    %v806 = vpop.f32.mrb[0].mxu0
    %v807 = vadd.f32 0.0, %v806
    %v808 = vpop.f32.mrb[0].mxu0
    %809 = vmatprep.mubr.f32.mxu0 0.0
    %810 = vmatmul.mubr.f32.gmra.mrb[0].mxu0 %v731
    %v811 = vpop.f32.mrb[0].mxu0
    %v812 = vadd.f32 0.0, %v811
    %v813 = vpop.f32.mrb[0].mxu0
    %814 = vmatprep.mubr.f32.mxu0 0.0
    %815 = vmatmul.mubr.f32.gmra.mrb[0].mxu0 %v733
    %v816 = vpop.f32.mrb[0].mxu0
    %v817 = vadd.f32 0.0, %v816
    %v818 = vpop.f32.mrb[0].mxu0
    %819 = vdwg.mxu0
    %v821 = vsel %vm70, %v648, 0
    %v824 = vsel %vm70, %v649, 0
    %v827 = vsel %vm70, %v650, 0
    %v830 = vsel %vm70, %v651, 0
    %832 = vmatprep.subr.mxu0 0.0
    %833 = vmatpush1.msra.mxu0 %v652
    %834 = vmatprep.subr.mxu0 0.0
    %835 = vmatpush1.msra.mxu0 %v653
    %836 = vmatprep.subr.mxu0 0.0
    %837 = vmatpush1.msra.mxu0 %v654
    %838 = vmatprep.subr.mxu0 0.0
    %839 = vmatpush1.msra.mxu0 %v655
    %840 = vmatprep.subr.mxu0 0.0
    %841 = vmatpush1.msra.mxu0 0.0
    %842 = vmatprep.subr.mxu0 0.0
    %843 = vmatpush1.msra.mxu0 0.0
    %844 = vmatprep.subr.mxu0 0.0
    %845 = vmatpush1.msra.mxu0 0.0
    %846 = vmatprep.subr.mxu0 0.0
    %847 = vmatpush1.msra.mxu0 0.0
    %848 = vmatprep.subr.mxu0 0.0
    %849 = vmatpush1.msra.mxu0 0.0
    %850 = vmatprep.subr.mxu0 0.0
    %851 = vmatpush1.msra.mxu0 0.0
    %852 = vmatprep.subr.mxu0 0.0
    %853 = vmatpush1.msra.mxu0 0.0
    %854 = vmatprep.subr.mxu0 0.0
    %855 = vmatpush1.msra.mxu0 0.0
    %856 = vmatprep.subr.mxu0 0.0
    %857 = vmatpush1.msra.mxu0 0.0
    %858 = vmatprep.subr.mxu0 0.0
    %859 = vmatpush1.msra.mxu0 0.0
    %860 = vmatprep.subr.mxu0 0.0
    %861 = vmatpush1.msra.mxu0 0.0
    %862 = vmatprep.subr.mxu0 0.0
    %863 = vmatpush1.msra.mxu0 0.0
    %864 = vmatprep.subr.mxu0 0.0
    %865 = vmatpush1.msra.mxu0 0.0
    %866 = vmatprep.subr.mxu0 0.0
    %867 = vmatpush1.msra.mxu0 0.0
    %868 = vmatprep.subr.mxu0 0.0
    %869 = vmatpush1.msra.mxu0 0.0
    %870 = vmatprep.subr.mxu0 0.0
    %871 = vmatpush1.msra.mxu0 0.0
    %872 = vmatprep.subr.mxu0 0.0
    %873 = vmatpush1.msra.mxu0 0.0
    %874 = vmatprep.subr.mxu0 0.0
    %875 = vmatpush1.msra.mxu0 0.0
    %876 = vmatprep.subr.mxu0 0.0
    %877 = vmatpush1.msra.mxu0 0.0
    %878 = vmatprep.subr.mxu0 0.0
    %879 = vmatpush1.msra.mxu0 0.0
    %880 = vmatprep.subr.mxu0 0.0
    %881 = vmatpush1.msra.mxu0 0.0
    %882 = vmatprep.subr.mxu0 0.0
    %883 = vmatpush1.msra.mxu0 0.0
    %884 = vmatprep.subr.mxu0 0.0
    %885 = vmatpush1.msra.mxu0 0.0
    %886 = vmatprep.subr.mxu0 0.0
    %887 = vmatpush1.msra.mxu0 0.0
    %888 = vmatprep.subr.mxu0 0.0
    %889 = vmatpush1.msra.mxu0 0.0
    %890 = vmatprep.subr.mxu0 0.0
    %891 = vmatpush1.msra.mxu0 0.0
    %892 = vmatprep.subr.mxu0 0.0
    %893 = vmatpush1.msra.mxu0 0.0
    %894 = vmatprep.subr.mxu0 0.0
    %895 = vmatpush1.msra.mxu0 0.0
    %896 = vmatprep.mubr.f32.mxu0 0.0
    %897 = vmatmul.mubr.f32.gmra.mrb[0].mxu0 %v821
    %v898 = vpop.f32.mrb[0].mxu0
    %v899 = vadd.f32 %v802, %v898
    %v900 = vpop.f32.mrb[0].mxu0
    %901 = vmatprep.mubr.f32.mxu0 0.0
    %902 = vmatmul.mubr.f32.gmra.mrb[0].mxu0 %v824
    %v903 = vpop.f32.mrb[0].mxu0
    %v904 = vadd.f32 %v807, %v903
    %v905 = vpop.f32.mrb[0].mxu0
    %906 = vmatprep.mubr.f32.mxu0 0.0
    %907 = vmatmul.mubr.f32.gmra.mrb[0].mxu0 %v827
    %v908 = vpop.f32.mrb[0].mxu0
    %v909 = vadd.f32 %v812, %v908
    %v910 = vpop.f32.mrb[0].mxu0
    %911 = vmatprep.mubr.f32.mxu0 0.0
    %912 = vmatmul.mubr.f32.gmra.mrb[0].mxu0 %v830
    %v913 = vpop.f32.mrb[0].mxu0
    %v914 = vadd.f32 %v817, %v913
    %v915 = vpop.f32.mrb[0].mxu0
    %916 = vdwg.mxu0
    %v917 = vld [vmem:[%s6] sm:$0x1]
    %v919 = vlaneseq
    %v920 = vshrl.u32 %v919, 7
    %v921 = vsub.s32 0, %v920
    %v922 = vrot.slane %v917, %v921
    %v924 = vadd.f32 %v899, %v922
    %v925 = vadd.f32 %v904, %v922
    %v926 = vadd.f32 %v909, %v922
    %v927 = vadd.f32 %v914, %v922
    %v928 = vmax.f32 %v924, 0.0
    %v929 = vmax.f32 %v925, 0.0
    %v930 = vmax.f32 %v926, 0.0
    %v931 = vmax.f32 %v927, 0.0
    %932 = vst.msk [vmem:[#allocation2] sm:$0xff] %vm70, %v928
    %933 = vst.msk [vmem:[#allocation2 + $0x8] sm:$0xff] %vm70, %v929
    %934 = vst.msk [vmem:[#allocation2 + $0x10] sm:$0xff] %vm70, %v930
    %935 = vst.msk [vmem:[#allocation2 + $0x18] sm:$0xff] %vm70, %v931
    // Predicated region
    $region30: #{graphsage_forward.1} parent=1 // pred_check
      _
    $region31: #{graphsage_forward.1} parent=1 // pred_check_branch
      %937 = sbr.rel (0) target = $region33
    $region32: #{graphsage_forward.1} parent=1 // pred_region
      %s939 = ssub.s32 512, 512
      %940 = vsyncadd [#allocation3], %s939
      %s941 = sshll.u32 [#allocation2], 4
      %s942 = int_to_ptr.vmem [resolvable:$true] %s941
      %947 = dma.vmem_to_hbm [thread:$0]  %s942, 512, %s7, [#allocation3], 128, 128, 8
    $region33: #{graphsage_forward.1} parent=1 // pred_fallthru
      _
    // Predicated region
    $region34: #{graphsage_forward.1} parent=1 // pred_check
      _
    $region35: #{graphsage_forward.1} parent=1 // pred_check_branch
      %949 = sbr.rel (0) target = $region37
    $region36: #{graphsage_forward.1} parent=1 // pred_region
      %950 = dma.done [#allocation3], 512
    $region37: #{graphsage_forward.1} parent=1 // pred_fallthru
      _
    %951 = vsyncpa [#allocation3], 1

</llo_original>
